<compile_context>
chip_gen: v6e
topology: v6e:2x2x1
jax: 0.10.0
libtpu: 0.0.40
codegen_flags: <defaults>
</compile_context>

<pallas_src>
import jax
import jax.numpy as jnp
from jax.experimental import pallas as pl
from jax.experimental.pallas import tpu as pltpu

# Synthetic "config" (the PyTorch module reads these from a global config).
config = {"n_age_bk": 8, "n_location": 16}


def _make_kernel(n_vocab: int):
    """Kernel closure over the static fused-vocab size."""

    def kernel(idx_ref, tbl_ref, out_ref):
        # idx_ref: [tile_b, 2]        int32   (VMEM)  col0 = age idx, col1 = n_age + loc idx
        # tbl_ref: [n_vocab, out_w]   float32 (VMEM)  block-diagonal fused table
        # out_ref: [tile_b, out_w]    float32 (VMEM)
        idx = idx_ref[...]                                    # [tb, 2]
        tb = idx.shape[0]

        age_idx = idx[:, 0:1]                                 # [tb, 1]
        loc_idx = idx[:, 1:2]                                 # [tb, 1] (already offset by n_age)

        # Two-hot selection matrix built with iota compares (pure VPU work).
        iota = jax.lax.broadcasted_iota(jnp.int32, (tb, n_vocab), 1)
        twohot = ((iota == age_idx) | (iota == loc_idx)).astype(jnp.float32)

        # Single MXU matmul -> single unmasked, lane-dense store.
        out_ref[...] = jnp.dot(twohot, tbl_ref[...],
                               preferred_element_type=jnp.float32)

    return kernel


def bk_user_loading(x1, emb_age, emb_location, *, tile_b=1024):
    """x1: [B, 2] int indices; emb_age: [n_age, D]; emb_location: [n_loc, D]."""
    B = x1.shape[0]
    n_age, D = emb_age.shape
    n_loc, D2 = emb_location.shape
    assert D == D2, "embedding dims must match"
    two_d = 2 * D
    n_vocab = n_age + n_loc

    # Lane-dense output width: next multiple of 128 (>= 128).
    out_w = max(128, ((two_d + 127) // 128) * 128)

    # Block-diagonal fused table: [[age_tbl, 0], [0, loc_tbl]], zero-padded lanes.
    tbl = jnp.zeros((n_vocab, out_w), dtype=jnp.float32)
    tbl = tbl.at[:n_age, :D].set(emb_age.astype(jnp.float32))
    tbl = tbl.at[n_age:, D:two_d].set(emb_location.astype(jnp.float32))

    # Fused indices: col 0 = age idx, col 1 = n_age + location idx (offset done once here).
    x1 = x1.astype(jnp.int32)
    idx_fused = jnp.stack([x1[:, 0], x1[:, 1] + n_age], axis=1)   # [B, 2]

    # Batch tiling: big blocks amortize per-step overhead; clamp for small B.
    # tile_b is a multiple of 8, or equals B (full-extent) -> satisfies (8,128) rule.
    tb = min(tile_b, B)
    grid = (pl.cdiv(B, tb),)

    out_padded = pl.pallas_call(
        _make_kernel(n_vocab),
        out_shape=jax.ShapeDtypeStruct((B, out_w), jnp.float32),
        grid=grid,
        in_specs=[
            pl.BlockSpec((tb, 2), lambda i: (i, 0)),            # per-tile fused indices
            pl.BlockSpec((n_vocab, out_w), lambda i: (0, 0)),   # fused table, VMEM-resident
        ],
        out_specs=pl.BlockSpec((tb, out_w), lambda i: (i, 0)),
        compiler_params=pltpu.CompilerParams(
            dimension_semantics=("parallel",)),                 # shard B across TCs (v7x)
    )(idx_fused, tbl)

    # Strip lane padding (no-op slice when 2*D is already a multiple of 128).
    return out_padded if out_w == two_d else out_padded[:, :two_d]


def _reference(x1, emb_age, emb_location):
    age = jnp.take(emb_age, x1[:, 0], axis=0)
    loc = jnp.take(emb_location, x1[:, 1], axis=0)
    return jnp.concatenate([age, loc], axis=1)


if __name__ == "__main__":
    key = jax.random.PRNGKey(0)
    k1, k2, k3, k4 = jax.random.split(key, 4)

    embedding_dim = 32
    batch = 8
    n_age = config["n_age_bk"]
    n_loc = config["n_location"]

    # Deterministic parameter init (nn.Embedding shapes: [num_embeddings, D]).
    emb_age = jax.random.normal(k1, (n_age, embedding_dim), dtype=jnp.float32)
    emb_location = jax.random.normal(k2, (n_loc, embedding_dim), dtype=jnp.float32)

    age_idx = jax.random.randint(k3, (batch,), 0, n_age, dtype=jnp.int32)
    loc_idx = jax.random.randint(k4, (batch,), 0, n_loc, dtype=jnp.int32)
    x1 = jnp.stack([age_idx, loc_idx], axis=1)   # [B, 2]

    out = bk_user_loading(x1, emb_age, emb_location)
    out = jax.block_until_ready(out)

    ref = _reference(x1, emb_age, emb_location)
    assert out.shape == (batch, 2 * embedding_dim)
    assert jnp.allclose(out, ref, atol=1e-5), "mismatch vs reference"
    print("KERNEL_OK")
</pallas_src>

<mosaic_0001>
module attributes {stable_mosaic.version = 11 : i64} {
  func.func @kernel(%arg0: i32, %arg1: memref<8x2xi32, #tpu.memory_space<vmem>>, %arg2: memref<24x128xf32, #tpu.memory_space<vmem>>, %arg3: memref<8x128xf32, #tpu.memory_space<vmem>>) attributes {dimension_semantics = [#tpu.dimension_semantics<parallel>], iteration_bounds = array<i64: 1>, scalar_prefetch = 0 : i64, scratch_operands = 0 : i64, tpu.core_type = #tpu.core_type<tc>, window_params = [{transform_indices = @transform_0, window_bounds = array<i64: 8, 2>}, {pipeline_mode = #tpu.pipeline_mode<synchronous>, transform_indices = @transform_1, window_bounds = array<i64: 24, 128>}, {transform_indices = @transform_2, window_bounds = array<i64: 8, 128>}]} {
    %c0 = arith.constant 0 : index
    %c0_0 = arith.constant 0 : index
    %0 = vector.load %arg1[%c0, %c0_0] : memref<8x2xi32, #tpu.memory_space<vmem>>, vector<8x2xi32>
    %1 = vector.extract_strided_slice %0 {offsets = [0, 0], sizes = [8, 1], strides = [1, 1]} : vector<8x2xi32> to vector<8x1xi32>
    %2 = vector.extract_strided_slice %0 {offsets = [0, 1], sizes = [8, 1], strides = [1, 1]} : vector<8x2xi32> to vector<8x1xi32>
    %3 = tpu.iota {dimensions = array<i32: 1>} : vector<8x24xi32>
    %4 = vector.broadcast %1 : vector<8x1xi32> to vector<8x24xi32>
    %5 = arith.cmpi eq, %3, %4 : vector<8x24xi32>
    %6 = vector.broadcast %2 : vector<8x1xi32> to vector<8x24xi32>
    %7 = arith.cmpi eq, %3, %6 : vector<8x24xi32>
    %8 = arith.ori %5, %7 : vector<8x24xi1>
    %9 = arith.extui %8 : vector<8x24xi1> to vector<8x24xi32>
    %10 = arith.sitofp %9 : vector<8x24xi32> to vector<8x24xf32>
    %c0_1 = arith.constant 0 : index
    %c0_2 = arith.constant 0 : index
    %11 = vector.load %arg2[%c0_1, %c0_2] : memref<24x128xf32, #tpu.memory_space<vmem>>, vector<24x128xf32>
    %cst = arith.constant dense<0.000000e+00> : vector<8x128xf32>
    %12 = tpu.matmul %10, %11, %cst {dimension_numbers = #tpu.dot_dimension_numbers<[1], [0], [0], [1], [0, 0, 1, 1], [], []>} : vector<8x24xf32>, vector<24x128xf32>, vector<8x128xf32> -> vector<8x128xf32>
    %c0_3 = arith.constant 0 : index
    %c0_4 = arith.constant 0 : index
    %13 = vector.load %arg3[%c0_3, %c0_4] : memref<8x128xf32, #tpu.memory_space<vmem>>, vector<8x128xf32>
    tpu.vector_store %arg3[%c0_3, %c0_4], %12 {strides = array<i32>} : memref<8x128xf32, #tpu.memory_space<vmem>>, vector<8x128xf32>,
    return
  }
  func.func @transform_0(%arg0: i32) -> (i32, i32) {
    %c0_i32 = arith.constant 0 : i32
    %c0_i32_0 = arith.constant 0 : i32
    return %arg0, %c0_i32 : i32, i32
  }
  func.func @transform_1(%arg0: i32) -> (i32, i32) {
    %c0_i32 = arith.constant 0 : i32
    %c0_i32_0 = arith.constant 0 : i32
    %c0_i32_1 = arith.constant 0 : i32
    return %c0_i32, %c0_i32_0 : i32, i32
  }
  func.func @transform_2(%arg0: i32) -> (i32, i32) {
    %c0_i32 = arith.constant 0 : i32
    %c0_i32_0 = arith.constant 0 : i32
    return %arg0, %c0_i32 : i32, i32
  }
}

</mosaic_0001>

<llo_original>
// kernel: tpu_custom_call.1
$region0: #{tpu_custom_call.1}
  #allocation0 [shape = 'u32[]', space=smem, size = 0x4, offset = 0x4, fixed_abs, tag = 'smem constant byte address 0x4 - core index']
  #allocation1 [shape = 'u32[144,128]{1,0:T(1,128)}', space=vmem, size = 0x12000, scoped, tag = 'internal scratch']
  %s0 = inlined_call_operand.vmem [shape: s32[8,2], index: 0, kind: input, shape index: {}]
  %s1 = inlined_call_operand.hbm [shape: f32[24,128], index: 1, kind: input, shape index: {}]
  %s2 = inlined_call_operand.hbm [shape: f32[8,128], index: 2, kind: output, shape index: {}]
  %s3 = sld [smem:[#allocation0]]
  $region22: #{tpu_custom_call.1} parent=0
    _
  %s5 = ssub.s32 1, %s3
  %s6 = scalar_select 0, %s5, %s3
  $region1: #{tpu_custom_call.1} parent=0
    #allocation2 [shape = 'u8[12288]{0}', space=vmem, size = 0x3000, scoped, tag = 'input window, operand 1, single buffered']
    #allocation3 [shape = 's32[1]{0}', space=sflag, size = 0x4, scoped, tag = 'scoped memory for tpu_custom_call.1']
    #allocation4 [shape = 's32[1]{0}', space=sflag, size = 0x4, scoped, tag = 'scoped memory for tpu_custom_call.1']
    #allocation5 [shape = 'u8[4096]{0}', space=vmem, size = 0x1000, scoped, tag = 'output window, operand 0, single buffered']
    %7 = vsyncpa [#allocation3], 0
    %8 = vsyncpa [#allocation4], 0
    // Predicated region
    $region2: #{tpu_custom_call.1} parent=1 // pred_check
      _
    $region3: #{tpu_custom_call.1} parent=1 // pred_check_branch
      %10 = sbr.rel (0) target = $region5
    $region4: #{tpu_custom_call.1} parent=1 // pred_region
      _
    $region5: #{tpu_custom_call.1} parent=1 // pred_fallthru
      _
    // Predicated region
    $region6: #{tpu_custom_call.1} parent=1 // pred_check
      _
    $region7: #{tpu_custom_call.1} parent=1 // pred_check_branch
      %12 = sbr.rel (0) target = $region9
    $region8: #{tpu_custom_call.1} parent=1 // pred_region
      %s14 = ssub.s32 384, 384
      %15 = vsyncadd [#allocation3], %s14
      %s16 = sshll.u32 [#allocation2], 4
      %s17 = int_to_ptr.vmem [resolvable:$true] %s16
      %22 = dma.hbm_to_vmem [thread:$0]  %s1, 384, %s17, [#allocation3], 128, 128, 8
    $region9: #{tpu_custom_call.1} parent=1 // pred_fallthru
      _
    // Predicated region
    $region10: #{tpu_custom_call.1} parent=1 // pred_check
      _
    $region11: #{tpu_custom_call.1} parent=1 // pred_check_branch
      %24 = sbr.rel (0) target = $region13
    $region12: #{tpu_custom_call.1} parent=1 // pred_region
      %25 = dma.done [#allocation3], 384
    $region13: #{tpu_custom_call.1} parent=1 // pred_fallthru
      _
    %v26 = vld [vmem:[%s0] sm:$0xff]
    %v27 = vlaneseq
    %v28 = vand.u32 %v27, 127
    %29 = vset.pattern.permute.xlu0 0
    %30 = vperm.xlu0 %29, %v26
    %v31 = vpop.permute.xlu0 %30
    %vm32 = vcmp.eq.s32.totalorder %v28, %v31
    %33 = vset.pattern.permute.xlu0 1
    %34 = vperm.xlu0 %33, %v26
    %v35 = vpop.permute.xlu0 %34
    %vm36 = vcmp.eq.s32.totalorder %v28, %v35
    %vm37 = vmor %vm32, %vm36
    %v38 = vsel %vm37, 1, 0
    %v39 = vcvt.s32.f32 %v38
    %v40 = vld [vmem:[#allocation2] sm:$0xff]
    %v41 = vld [vmem:[#allocation2 + $0x8] sm:$0xff]
    %v42 = vld [vmem:[#allocation2 + $0x10] sm:$0xff]
    %vm43 = vcmask 195584
    %v45 = vsel %vm43, %v39, 0
    %47 = vmatprep.subr.mxu0 0.0
    %48 = vmatpush1.msra.mxu0 0.0
    %49 = vmatprep.subr.mxu0 0.0
    %50 = vmatpush1.msra.mxu0 0.0
    %51 = vmatprep.subr.mxu0 0.0
    %52 = vmatpush1.msra.mxu0 0.0
    %53 = vmatprep.subr.mxu0 0.0
    %54 = vmatpush1.msra.mxu0 0.0
    %55 = vmatprep.subr.mxu0 0.0
    %56 = vmatpush1.msra.mxu0 0.0
    %57 = vmatprep.subr.mxu0 0.0
    %58 = vmatpush1.msra.mxu0 0.0
    %59 = vmatprep.subr.mxu0 0.0
    %60 = vmatpush1.msra.mxu0 0.0
    %61 = vmatprep.subr.mxu0 0.0
    %62 = vmatpush1.msra.mxu0 0.0
    %63 = vmatprep.subr.mxu0 0.0
    %64 = vmatpush1.msra.mxu0 0.0
    %65 = vmatprep.subr.mxu0 0.0
    %66 = vmatpush1.msra.mxu0 0.0
    %67 = vmatprep.subr.mxu0 0.0
    %68 = vmatpush1.msra.mxu0 0.0
    %69 = vmatprep.subr.mxu0 0.0
    %70 = vmatpush1.msra.mxu0 0.0
    %71 = vmatprep.subr.mxu0 0.0
    %72 = vmatpush1.msra.mxu0 0.0
    %73 = vmatprep.subr.mxu0 0.0
    %74 = vmatpush1.msra.mxu0 %v42
    %75 = vmatprep.subr.mxu0 0.0
    %76 = vmatpush1.msra.mxu0 %v41
    %77 = vmatprep.subr.mxu0 0.0
    %78 = vmatpush1.msra.mxu0 %v40
    %79 = vmatprep.subr.mxu0 0.0
    %80 = vmatpush2.msra.mxu0 0.0
    %81 = vmatprep.subr.mxu0 0.0
    %82 = vmatpush2.msra.mxu0 0.0
    %83 = vmatprep.subr.mxu0 0.0
    %84 = vmatpush2.msra.mxu0 0.0
    %85 = vmatprep.subr.mxu0 0.0
    %86 = vmatpush2.msra.mxu0 0.0
    %87 = vmatprep.subr.mxu0 0.0
    %88 = vmatpush2.msra.mxu0 0.0
    %89 = vmatprep.subr.mxu0 0.0
    %90 = vmatpush2.msra.mxu0 0.0
    %91 = vmatprep.subr.mxu0 0.0
    %92 = vmatpush2.msra.mxu0 0.0
    %93 = vmatprep.subr.mxu0 0.0
    %94 = vmatpush2.msra.mxu0 0.0
    %95 = vmatprep.subr.mxu0 0.0
    %96 = vmatpush2.msra.mxu0 0.0
    %97 = vmatprep.subr.mxu0 0.0
    %98 = vmatpush2.msra.mxu0 0.0
    %99 = vmatprep.subr.mxu0 0.0
    %100 = vmatpush2.msra.mxu0 0.0
    %101 = vmatprep.subr.mxu0 0.0
    %102 = vmatpush2.msra.mxu0 0.0
    %103 = vmatprep.subr.mxu0 0.0
    %104 = vmatpush2.msra.mxu0 0.0
    %105 = vmatprep.subr.mxu0 0.0
    %106 = vmatpush2.msra.mxu0 0.0
    %107 = vmatprep.subr.mxu0 0.0
    %108 = vmatpush2.msra.mxu0 0.0
    %109 = vmatprep.subr.mxu0 0.0
    %110 = vmatpush2.msra.mxu0 0.0
    %111 = vmatprep.mubr.f32.mxu0 0.0
    %112 = vmatmul.mubr.f32.gmra.mxu0 %v45
    %v113 = vpop.f32.mrf.mxu0
    %v114 = vadd.f32 0.0, %v113
    %v115 = vpop.f32.mrf.mxu0
    %116 = vdwg.mxu0
    %117 = vst [vmem:[#allocation5] sm:$0xff] %v114
    // Predicated region
    $region14: #{tpu_custom_call.1} parent=1 // pred_check
      _
    $region15: #{tpu_custom_call.1} parent=1 // pred_check_branch
      %119 = sbr.rel (0) target = $region17
    $region16: #{tpu_custom_call.1} parent=1 // pred_region
      %s121 = ssub.s32 128, 128
      %122 = vsyncadd [#allocation4], %s121
      %s124 = sshll.u32 [#allocation5], 4
      %s125 = int_to_ptr.vmem [resolvable:$true] %s124
      %127 = dma.vmem_to_hbm [thread:$0]  %s125, 128, %s2, [#allocation4]
    $region17: #{tpu_custom_call.1} parent=1 // pred_fallthru
      _
    // Predicated region
    $region18: #{tpu_custom_call.1} parent=1 // pred_check
      _
    $region19: #{tpu_custom_call.1} parent=1 // pred_check_branch
      %129 = sbr.rel (0) target = $region21
    $region20: #{tpu_custom_call.1} parent=1 // pred_region
      %130 = dma.done [#allocation4], 128
    $region21: #{tpu_custom_call.1} parent=1 // pred_fallthru
      _
    %131 = vsyncpa [#allocation3], 1
    %132 = vsyncpa [#allocation4], 1

</llo_original>
